<compile_context>
chip_gen: v5e
topology: v5e:2x2
jax: 0.10.0
libtpu: 0.0.40
codegen_flags: <defaults>
</compile_context>

<pallas_src>
import functools

import jax
import jax.numpy as jnp
from jax.experimental import pallas as pl
from jax.experimental.pallas import tpu as pltpu


DMODEL = 32
OUT_FEATURES = 2
EPS = 1e-3                        # Constraint eps (see TODO above)

_MIN_TILED_FOLDED_ROWS = 1024     # below 2x this, use a single padded block
_MAX_INPUT_BLOCK_BYTES = 8 << 20  # ~8 MiB activation block (double-buffered)
_VMEM_LIMIT_BYTES = 32 << 20      # raises v5e's 16 MiB scoped default; <= v7x physical


def _round_up(x, n):
    return ((x + n - 1) // n) * n


def _input_block_bytes_target():
    """Generation-aware input-block size in bytes."""
    try:
        vmem = pltpu.get_tpu_info().vmem_capacity_bytes
    except Exception:            # older jax / no TPU query: safe fallback
        vmem = 64 << 20
    # Double-buffered input block (+ small outputs) must stay well inside scoped VMEM.
    return max(2 << 20, min(_MAX_INPUT_BLOCK_BYTES, vmem // 8))


def _folded_normal_head_kernel(x_ref, wt_ref, b_ref, loc_ref, scale_ref, *, eps):
    # x_ref:     (tm4, lanes)      `fold` original rows folded into the 128-lane dim
    # wt_ref:    (2*fold, lanes)   transposed block-diagonal Linear weight
    #                              rows [0, fold) -> loc, rows [fold, 2*fold) -> scale
    # b_ref:     (2*fold, 1) f32   matching bias column
    # loc_ref:   (fold, tm4) f32   loc of original row (fold*r + i) stored at [i, r]
    # scale_ref: (fold, tm4) f32   constrained scale, same layout
    #
    # The dot contracts the lane (feature) dim of BOTH operands (A @ B^T form), so the
    # result is already lane-dense over the big row dim and the softplus epilogue plus
    # the stores run on full 128-lane vregs.
    # TODO(synk): verify with pl.lower_as_mlir that Mosaic does not materialize an XLU
    #             relayout of the large x block for the transposed contraction.
    fold = loc_ref.shape[0]
    params_t = jax.lax.dot_general(
        wt_ref[...], x_ref[...],
        dimension_numbers=(((1,), (1,)), ((), ())),
        preferred_element_type=jnp.float32,
    ) + b_ref[...]                                      # (2*fold, tm4), f32

    loc_ref[...] = params_t[:fold, :].astype(loc_ref.dtype)
    # Constraint: numerically-stable softplus + eps on the scale rows only.
    scale_ref[...] = (jnp.logaddexp(params_t[fold:, :], 0.0) + eps).astype(scale_ref.dtype)


def make_folded_normal_head(weight, bias, *, eps=EPS):
    """Binds Linear(dmodel, 2) parameters once; returns jitted forward(representation).

    forward(representation[..., d]) -> (loc, scale), each shaped representation.shape[:-1];
    these are the parameters of the FoldedNormal distribution the PyTorch module builds.
    """
    d, out_features = weight.shape
    assert out_features == OUT_FEATURES

    fold = 128 // d if (d <= 128 and 128 % d == 0) else 1
    lanes = fold * d
    nrows = OUT_FEATURES * fold

    # One-time parameter preprocessing (hoisted out of the per-call path):
    # block-diagonal transposed weight with all loc rows first, scale rows second.
    w32 = jnp.asarray(weight, jnp.float32)
    eye = jnp.eye(fold, dtype=jnp.float32)
    w_big_t = jnp.concatenate(
        [jnp.kron(eye, w32[:, 0:1]), jnp.kron(eye, w32[:, 1:2])], axis=1
    ).T                                                  # (nrows, lanes) f32
    b_big = jnp.repeat(jnp.asarray(bias, jnp.float32), fold).reshape(nrows, 1)

    block_bytes = _input_block_bytes_target()
    kernel = functools.partial(_folded_normal_head_kernel, eps=eps)

    @jax.jit
    def forward(representation):
        lead_shape = representation.shape[:-1]
        assert representation.shape[-1] == d

        x = representation.reshape(-1, d)        # free reshape; native dtype streamed
        m = x.shape[0]
        itemsize = x.dtype.itemsize

        m4_raw = -(-m // fold) if m else 1       # folded rows needed
        tm4_cap = max(128, (block_bytes // (lanes * itemsize)) // 128 * 128)

        if m4_raw >= 2 * _MIN_TILED_FOLDED_ROWS:
            # Tiled path: no full-array row padding; pl.cdiv grid, Pallas masks the
            # partial edge block (safe: each output lane depends only on its own
            # folded input row).  Cap the tile at ~half the work so the "parallel"
            # grid axis has >= 2 steps (v7x dual-TensorCore sharding; no-op on 1-TC).
            m4_p = m4_raw
            tm4 = min(tm4_cap, _round_up(-(-m4_raw // 2), 128))
        else:
            m4_p = _round_up(m4_raw, 8)
            tm4 = m4_p

        pad_rows = m4_p * fold - m
        if pad_rows:
            # TODO(synk): tail pad is a full-array copy; only hit when m is not a
            #             multiple of `fold` (or for tiny inputs) and is negligible.
            x = jnp.pad(x, ((0, pad_rows), (0, 0)))
        x2 = x.reshape(m4_p, lanes)
        wt = w_big_t.astype(x2.dtype)
        # TODO(synk): with bf16 activations the Linear weight is quantized to bf16 too
        #             (slight deviation from a mixed-precision PyTorch Linear).

        grid = (pl.cdiv(m4_p, tm4),)
        cost = pl.CostEstimate(
            flops=2 * m4_p * lanes * nrows,
            transcendentals=2 * fold * m4_p,          # exp + log1p per scale element
            bytes_accessed=(m4_p * lanes * itemsize   # activations
                            + 2 * fold * m4_p * 4     # loc + scale outputs
                            + nrows * lanes * 4 + nrows * 4),
        )

        loc_t, scale_t = pl.pallas_call(
            kernel,
            out_shape=(jax.ShapeDtypeStruct((fold, m4_p), jnp.float32),
                       jax.ShapeDtypeStruct((fold, m4_p), jnp.float32)),
            grid=grid,
            in_specs=[
                pl.BlockSpec((tm4, lanes), lambda i: (i, 0)),     # folded activations
                pl.BlockSpec((nrows, lanes), lambda i: (0, 0)),   # weight (resident)
                pl.BlockSpec((nrows, 1), lambda i: (0, 0)),       # bias (resident)
            ],
            out_specs=[
                pl.BlockSpec((fold, tm4), lambda i: (0, i)),      # loc
                pl.BlockSpec((fold, tm4), lambda i: (0, i)),      # scale
            ],
            compiler_params=pltpu.CompilerParams(
                dimension_semantics=("parallel",),
                vmem_limit_bytes=_VMEM_LIMIT_BYTES),
            cost_estimate=cost,
        )(x2, wt, b_big)

        # Unfold (fuses with the pallas_call inside this jit): loc_t[i, r] holds the
        # parameter of original row (r*fold + i).
        loc = loc_t.T.reshape(-1)[:m].reshape(lead_shape)
        scale = scale_t.T.reshape(-1)[:m].reshape(lead_shape)
        return loc, scale

    return forward


def _reference(representation, weight, bias, eps=EPS):
    params = representation.astype(jnp.float32) @ weight.astype(jnp.float32) + bias
    loc = params[..., 0]
    scale = jax.nn.softplus(params[..., 1]) + eps
    return loc, scale


if __name__ == "__main__":
    key = jax.random.PRNGKey(0)
    kw, kb, kx = jax.random.split(key, 3)

    # Deterministic synthetic Linear(dmodel, 2) parameters.
    weight = 0.1 * jax.random.normal(kw, (DMODEL, OUT_FEATURES), dtype=jnp.float32)
    bias = 0.1 * jax.random.normal(kb, (OUT_FEATURES,), dtype=jnp.float32)

    forward = make_folded_normal_head(weight, bias)

    # Small shape consistent with the module (batch=2, seq=8, dmodel=32), a ragged
    # shape exercising the padded single-block path, and a larger shape exercising
    # the multi-step tiled / edge-masked path.
    for lead in [(2, 8), (5, 443), (48, 401)]:
        kx, sub = jax.random.split(kx)
        representation = jax.random.normal(sub, lead + (DMODEL,), dtype=jnp.float32)

        loc, scale = forward(representation)
        jax.block_until_ready((loc, scale))

        loc_ref, scale_ref = _reference(representation, weight, bias)
        assert loc.shape == lead and scale.shape == lead
        assert jnp.allclose(loc, loc_ref, rtol=1e-5, atol=1e-5)
        assert jnp.allclose(scale, scale_ref, rtol=1e-5, atol=1e-5)
        assert bool(jnp.all(scale > 0))   # FoldedNormal requires positive scale

    print("KERNEL_OK")
</pallas_src>

<mosaic_0001>
module attributes {stable_mosaic.version = 11 : i64} {
  func.func @_folded_normal_head_kernel(%arg0: i32, %arg1: memref<8x128xf32, #tpu.memory_space<vmem>>, %arg2: memref<8x128xf32, #tpu.memory_space<vmem>>, %arg3: memref<8x1xf32, #tpu.memory_space<vmem>>, %arg4: memref<4x8xf32, #tpu.memory_space<vmem>>, %arg5: memref<4x8xf32, #tpu.memory_space<vmem>>) attributes {dimension_semantics = [#tpu.dimension_semantics<parallel>], iteration_bounds = array<i64: 1>, scalar_prefetch = 0 : i64, scratch_operands = 0 : i64, tpu.core_type = #tpu.core_type<tc>, window_params = [{transform_indices = @transform_0, window_bounds = array<i64: 8, 128>}, {pipeline_mode = #tpu.pipeline_mode<synchronous>, transform_indices = @transform_1, window_bounds = array<i64: 8, 128>}, {pipeline_mode = #tpu.pipeline_mode<synchronous>, transform_indices = @transform_2, window_bounds = array<i64: 8, 1>}, {transform_indices = @transform_3, window_bounds = array<i64: 4, 8>}, {transform_indices = @transform_4, window_bounds = array<i64: 4, 8>}]} {
    %c0 = arith.constant 0 : index
    %c0_0 = arith.constant 0 : index
    %0 = vector.load %arg2[%c0, %c0_0] : memref<8x128xf32, #tpu.memory_space<vmem>>, vector<8x128xf32>
    %c0_1 = arith.constant 0 : index
    %c0_2 = arith.constant 0 : index
    %1 = vector.load %arg1[%c0_1, %c0_2] : memref<8x128xf32, #tpu.memory_space<vmem>>, vector<8x128xf32>
    %cst = arith.constant dense<0.000000e+00> : vector<8x8xf32>
    %2 = tpu.matmul %0, %1, %cst {dimension_numbers = #tpu.dot_dimension_numbers<[1], [1], [0], [0], [0, 0, 1, 0], [], []>} : vector<8x128xf32>, vector<8x128xf32>, vector<8x8xf32> -> vector<8x8xf32>
    %c0_3 = arith.constant 0 : index
    %c0_4 = arith.constant 0 : index
    %3 = vector.load %arg3[%c0_3, %c0_4] : memref<8x1xf32, #tpu.memory_space<vmem>>, vector<8x1xf32>
    %4 = vector.broadcast %3 : vector<8x1xf32> to vector<8x8xf32>
    %5 = arith.addf %2, %4 : vector<8x8xf32>
    %6 = vector.extract_strided_slice %5 {offsets = [0, 0], sizes = [4, 8], strides = [1, 1]} : vector<8x8xf32> to vector<4x8xf32>
    %c0_5 = arith.constant 0 : index
    %c0_6 = arith.constant 0 : index
    %7 = vector.load %arg4[%c0_5, %c0_6] : memref<4x8xf32, #tpu.memory_space<vmem>>, vector<4x8xf32>
    tpu.vector_store %arg4[%c0_5, %c0_6], %6 {strides = array<i32>} : memref<4x8xf32, #tpu.memory_space<vmem>>, vector<4x8xf32>,
    %8 = vector.extract_strided_slice %5 {offsets = [4, 0], sizes = [4, 8], strides = [1, 1]} : vector<8x8xf32> to vector<4x8xf32>
    %cst_7 = arith.constant 0.000000e+00 : f32
    %9 = vector.broadcast %cst_7 : f32 to vector<4x8xf32>
    %10 = arith.maximumf %8, %9 : vector<4x8xf32>
    %11 = vector.broadcast %cst_7 : f32 to vector<4x8xf32>
    %12 = arith.subf %8, %11 : vector<4x8xf32>
    %13 = arith.cmpf one, %12, %12 : vector<4x8xf32>
    %14 = vector.broadcast %cst_7 : f32 to vector<4x8xf32>
    %15 = arith.addf %8, %14 : vector<4x8xf32>
    %16 = math.absf %12 : vector<4x8xf32>
    %cst_8 = arith.constant 0.000000e+00 : f32
    %17 = vector.broadcast %cst_8 : f32 to vector<4x8xf32>
    %18 = arith.subf %17, %16 : vector<4x8xf32>
    %19 = math.exp %18 : vector<4x8xf32>
    %20 = math.log1p %19 : vector<4x8xf32>
    %21 = arith.addf %10, %20 : vector<4x8xf32>
    %22 = arith.select %13, %15, %21 : vector<4x8xi1>, vector<4x8xf32>
    %cst_9 = arith.constant 1.000000e-03 : f32
    %23 = vector.broadcast %cst_9 : f32 to vector<4x8xf32>
    %24 = arith.addf %22, %23 : vector<4x8xf32>
    %c0_10 = arith.constant 0 : index
    %c0_11 = arith.constant 0 : index
    %25 = vector.load %arg5[%c0_10, %c0_11] : memref<4x8xf32, #tpu.memory_space<vmem>>, vector<4x8xf32>
    tpu.vector_store %arg5[%c0_10, %c0_11], %24 {strides = array<i32>} : memref<4x8xf32, #tpu.memory_space<vmem>>, vector<4x8xf32>,
    return
  }
  func.func @transform_0(%arg0: i32) -> (i32, i32) {
    %c0_i32 = arith.constant 0 : i32
    %c0_i32_0 = arith.constant 0 : i32
    return %arg0, %c0_i32 : i32, i32
  }
  func.func @transform_1(%arg0: i32) -> (i32, i32) {
    %c0_i32 = arith.constant 0 : i32
    %c0_i32_0 = arith.constant 0 : i32
    %c0_i32_1 = arith.constant 0 : i32
    return %c0_i32, %c0_i32_0 : i32, i32
  }
  func.func @transform_2(%arg0: i32) -> (i32, i32) {
    %c0_i32 = arith.constant 0 : i32
    %c0_i32_0 = arith.constant 0 : i32
    %c0_i32_1 = arith.constant 0 : i32
    return %c0_i32, %c0_i32_0 : i32, i32
  }
  func.func @transform_3(%arg0: i32) -> (i32, i32) {
    %c0_i32 = arith.constant 0 : i32
    %c0_i32_0 = arith.constant 0 : i32
    return %c0_i32, %arg0 : i32, i32
  }
  func.func @transform_4(%arg0: i32) -> (i32, i32) {
    %c0_i32 = arith.constant 0 : i32
    %c0_i32_0 = arith.constant 0 : i32
    return %c0_i32, %arg0 : i32, i32
  }
}

</mosaic_0001>

<llo_original>
// kernel: forward.1
$region0: #{forward.1}
  #allocation0 [shape = 'u32[]', space=smem, size = 0x4, offset = 0x4, fixed_abs, tag = 'smem constant byte address 0x4 - core index']
  #allocation1 [shape = 'u32[72,128]{1,0:T(1,128)}', space=vmem, size = 0x9000, scoped, tag = 'internal scratch']
  %s0 = inlined_call_operand.vmem [shape: f32[8,128], index: 0, kind: input, shape index: {}]
  %s1 = inlined_call_operand.vmem [shape: f32[8,128], index: 1, kind: input, shape index: {}]
  %s2 = inlined_call_operand.vmem [shape: f32[8,1], index: 2, kind: input, shape index: {}]
  %s3 = inlined_call_operand.vmem [shape: f32[4,8], index: 3, kind: output, shape index: {0}]
  %s4 = inlined_call_operand.vmem [shape: f32[4,8], index: 4, kind: output, shape index: {1}]
  %5 = xla_tuple %s3, %s4
  %s6 = sld [smem:[#allocation0]]
  $region30: #{forward.1} parent=0
    _
  %s8 = ssub.s32 1, %s6
  %s9 = scalar_select 0, %s8, %s6
  // Predicated region
  $region2: #{forward.1} parent=0 // pred_check
    _
  $region3: #{forward.1} parent=0 // pred_check_branch
    %11 = sbr.rel (0) target = $region5
  $region4: #{forward.1} parent=0 // pred_region
    _
  $region5: #{forward.1} parent=0 // pred_fallthru
    _
  // Predicated region
  $region6: #{forward.1} parent=0 // pred_check
    _
  $region7: #{forward.1} parent=0 // pred_check_branch
    %13 = sbr.rel (0) target = $region9
  $region8: #{forward.1} parent=0 // pred_region
    _
  $region9: #{forward.1} parent=0 // pred_fallthru
    _
  // Predicated region
  $region10: #{forward.1} parent=0 // pred_check
    _
  $region11: #{forward.1} parent=0 // pred_check_branch
    %15 = sbr.rel (0) target = $region13
  $region12: #{forward.1} parent=0 // pred_region
    _
  $region13: #{forward.1} parent=0 // pred_fallthru
    _
  %v16 = vld [vmem:[%s1] sm:$0xff]
  %v17 = vld [vmem:[%s0] sm:$0xff]
  %v18 = vld [vmem:[%s2] sm:$0xff]
  %20 = vset.pattern.permute.xlu0 0
  %21 = vperm.xlu0 %20, %v18
  %v22 = vpop.permute.xlu0 %21
  %24 = vmatpush.xpose.msra.mxu0 0.0
  %25 = vmatpush.xpose.msra.mxu0 0.0
  %26 = vmatpush.xpose.msra.mxu0 0.0
  %27 = vmatpush.xpose.msra.mxu0 0.0
  %28 = vmatpush.xpose.msra.mxu0 0.0
  %29 = vmatpush.xpose.msra.mxu0 0.0
  %30 = vmatpush.xpose.msra.mxu0 0.0
  %31 = vmatpush.xpose.msra.mxu0 0.0
  %32 = vmatpush.xpose.msra.mxu0 0.0
  %33 = vmatpush.xpose.msra.mxu0 0.0
  %34 = vmatpush.xpose.msra.mxu0 0.0
  %35 = vmatpush.xpose.msra.mxu0 0.0
  %36 = vmatpush.xpose.msra.mxu0 0.0
  %37 = vmatpush.xpose.msra.mxu0 0.0
  %38 = vmatpush.xpose.msra.mxu0 0.0
  %39 = vmatpush.xpose.msra.mxu0 %v17
  %40 = vmatmul.f32.gmra.mxu0 %v16
  %v41 = vpop.f32.mrf.mxu0
  %v42 = vadd.f32 %v22, %v41
  %43 = vdwg.mxu0
  %vm44 = vcmask 60416
  %45 = vst.msk [vmem:[%s3] sm:$0xf] %vm44, %v42
  %v46 = vmax.f32 %v42, 0.0
  %vm47 = vcmp.ne.f32.partialorder %v42, %v42
  %v48 = vadd.f32 %v42, 0.0
  %v49 = vand.u32 2147483647, %v42
  %v50 = vsub.f32 0.0, %v49
  %v51 = vmul.f32 %v50, 1.442695
  %v52 = vpow.pop %v51
  %v53 = vadd.f32 %v52, 1.0
  %v54 = vlog2.pop %v53
  %v55 = vmul.f32 %v54, 0.6931472
  %v56 = vmul.f32 -0.5, %v52
  %v57 = vadd.f32 %v56, 1.0
  %v58 = vmul.f32 %v57, %v52
  %v59 = vand.u32 2147483647, %v52
  %vm60 = vcmp.lt.f32.partialorder %v59, 0.0004427343
  %v61 = vsel %vm60, %v58, %v55
  %v62 = vadd.f32 %v46, %v61
  %v63 = vsel %vm47, %v48, %v62
  %v64 = vadd.f32 %v63, 0.001
  %vm65 = vcmask 64516
  %66 = vst.msk [vmem:[%s4 - $0x4] sm:$0xf0] %vm65, %v64
  // Predicated region
  $region14: #{forward.1} parent=0 // pred_check
    _
  $region15: #{forward.1} parent=0 // pred_check_branch
    %68 = sbr.rel (0) target = $region17
  $region16: #{forward.1} parent=0 // pred_region
    _
  $region17: #{forward.1} parent=0 // pred_fallthru
    _
  // Predicated region
  $region18: #{forward.1} parent=0 // pred_check
    _
  $region19: #{forward.1} parent=0 // pred_check_branch
    %70 = sbr.rel (0) target = $region21
  $region20: #{forward.1} parent=0 // pred_region
    _
  $region21: #{forward.1} parent=0 // pred_fallthru
    _
  // Predicated region
  $region22: #{forward.1} parent=0 // pred_check
    _
  $region23: #{forward.1} parent=0 // pred_check_branch
    %72 = sbr.rel (0) target = $region25
  $region24: #{forward.1} parent=0 // pred_region
    _
  $region25: #{forward.1} parent=0 // pred_fallthru
    _
  // Predicated region
  $region26: #{forward.1} parent=0 // pred_check
    _
  $region27: #{forward.1} parent=0 // pred_check_branch
    %74 = sbr.rel (0) target = $region29
  $region28: #{forward.1} parent=0 // pred_region
    _
  $region29: #{forward.1} parent=0 // pred_fallthru
    _

</llo_original>
